<compile_context>
chip_gen: v5e
topology: v5e:2x2
jax: 0.10.0
libtpu: 0.0.40
codegen_flags: <defaults>
</compile_context>

<pallas_src>
import functools

import jax
import jax.numpy as jnp
from jax.experimental import pallas as pl
from jax.experimental.pallas import tpu as pltpu


# ----------------------------------------------------------------------------
# helpers
# ----------------------------------------------------------------------------
def _round_up(x, m):
    return ((x + m - 1) // m) * m


def _pad_to(a, rows, cols):
    r, c = a.shape
    return jnp.pad(a, ((0, rows - r), (0, cols - c)))


def _block_diag_xw(w_stacked):
    """[N, out, in] PyTorch-convention stack -> block-diag [N*in, N*out] for y = x @ W.

    Vectorized (single einsum) instead of a Python .at[].set loop.
    """
    n, out_dim, in_dim = w_stacked.shape
    wt = jnp.transpose(w_stacked, (0, 2, 1))                  # [N, in, out]
    eye = jnp.eye(n, dtype=w_stacked.dtype)
    bd = jnp.einsum('ij,iab->iajb', eye, wt)                   # [N, in, N, out]
    return bd.reshape(n * in_dim, n * out_dim)


# ----------------------------------------------------------------------------
# Fused kernel body: encoders + decoders + predictors, 4 MXU matmuls total.
# x is bf16; all accumulation / bias / ReLU in f32; outputs f32 lane-dense.
# ----------------------------------------------------------------------------
def _miae_kernel(x_ref, w1_ref, b1_ref, w2_ref, b2_ref, wzc_ref, bzc_ref,
                 w4_ref, b4_ref, dec_ref, pred_ref):
    fhp = w4_ref.shape[0]          # lane-aligned split point (multiple of 128)
    wdt = w1_ref.dtype             # bf16 (MXU input dtype)

    x = x_ref[...]                                                   # (Tb, FL) bf16
    h = jnp.dot(x, w1_ref[...], preferred_element_type=jnp.float32) + b1_ref[...]
    h = jnp.maximum(h, 0.0)                                          # f32 ReLU
    z = jnp.dot(h.astype(wdt), w2_ref[...],
                preferred_element_type=jnp.float32) + b2_ref[...]    # (Tb, FZ)
    # z column layout == torch.cat(latents, dim=-1)

    # Fused decoder-hidden + predictor matmul: [dh_pre | pred_pre]
    zc = jnp.dot(z.astype(wdt), wzc_ref[...],
                 preferred_element_type=jnp.float32) + bzc_ref[...]  # (Tb, FHp+TOp)
    dh = jnp.maximum(zc[:, :fhp], 0.0)                               # lane-aligned slice
    dec_ref[...] = jnp.dot(dh.astype(wdt), w4_ref[...],
                           preferred_element_type=jnp.float32) + b4_ref[...]
    pred_ref[...] = zc[:, fhp:]                                      # lane-aligned slice


# ----------------------------------------------------------------------------
# Wrapper: batch-gridded pallas_call, weights resident, outputs lane-dense.
# ----------------------------------------------------------------------------
def miae_forward(x, weights, *, T, O, tile_b=256):
    """x: [B, F, L] f32.  Returns (decoded [B, F, L], predicted [B, T, O]) f32."""
    w1, b1, w2, b2, wzc, bzc, w4, b4 = weights
    B, F, L = x.shape
    FL = F * L
    FZ = w2.shape[1]
    FHp = w1.shape[1]                 # padded hidden width (mult. of 128)
    FLp = w4.shape[1]                 # padded decode width (mult. of 128)
    TOp = wzc.shape[1] - FHp          # padded predictor width (mult. of 128)
    TO = T * O

    # Batch tile: sublane multiple, capped by the (padded) batch.
    tile_b = max(8, min(int(tile_b), _round_up(B, 8)))
    B_pad = _round_up(B, tile_b)

    x_flat = x.reshape(B, FL).astype(w1.dtype)      # bf16 halves x DMA
    if B_pad != B:
        x_flat = jnp.pad(x_flat, ((0, B_pad - B), (0, 0)))
    grid = (B_pad // tile_b,)

    # Cost hint + explicit VMEM budget (resident weights ~2x buffered + I/O tiles).
    flops = 2 * B_pad * (FL * FHp + FHp * FZ + FZ * (FHp + TOp) + FHp * FLp)
    w_bytes = sum(int(a.size) * a.dtype.itemsize for a in weights)
    out_bytes = B_pad * (FLp + TOp) * 4
    bytes_accessed = int(B_pad * FL * x_flat.dtype.itemsize + w_bytes + out_bytes)
    blk_io = tile_b * (FL * x_flat.dtype.itemsize + (FLp + TOp) * 4)
    scratch = tile_b * (2 * FHp + FZ + TOp + FLp) * 4
    vmem_limit = int(min(64 << 20,                       # v7x physical ceiling
                         max(32 << 20,
                             2 * (w_bytes + blk_io) + scratch + (4 << 20))))

    dec_flat, pred_flat = pl.pallas_call(
        _miae_kernel,
        out_shape=(jax.ShapeDtypeStruct((B_pad, FLp), jnp.float32),
                   jax.ShapeDtypeStruct((B_pad, TOp), jnp.float32)),
        grid_spec=pltpu.PrefetchScalarGridSpec(
            num_scalar_prefetch=0,
            grid=grid,
            in_specs=[
                pl.BlockSpec((tile_b, FL), lambda i: (i, 0)),   # x: tiled over B
                pl.BlockSpec(w1.shape, lambda i: (0, 0)),       # weights/biases:
                pl.BlockSpec(b1.shape, lambda i: (0, 0)),       #   constant index_map
                pl.BlockSpec(w2.shape, lambda i: (0, 0)),       #   -> VMEM-resident
                pl.BlockSpec(b2.shape, lambda i: (0, 0)),
                pl.BlockSpec(wzc.shape, lambda i: (0, 0)),
                pl.BlockSpec(bzc.shape, lambda i: (0, 0)),
                pl.BlockSpec(w4.shape, lambda i: (0, 0)),
                pl.BlockSpec(b4.shape, lambda i: (0, 0)),
            ],
            out_specs=[
                pl.BlockSpec((tile_b, FLp), lambda i: (i, 0)),  # lane-dense slabs
                pl.BlockSpec((tile_b, TOp), lambda i: (i, 0)),
            ],
        ),
        compiler_params=pltpu.CompilerParams(
            dimension_semantics=("parallel",),        # v7x: shard B over both TCs
            vmem_limit_bytes=vmem_limit),
        cost_estimate=pl.CostEstimate(flops=flops, transcendentals=0,
                                      bytes_accessed=bytes_accessed),
    )(x_flat, w1, b1, w2, b2, wzc, bzc, w4, b4)

    decoded = dec_flat[:B, :FL].reshape(B, F, L)      # strip pad (cheap slice)
    predicted = pred_flat[:B, :TO].reshape(B, T, O)
    return decoded, predicted


# ----------------------------------------------------------------------------
# One-time parameter packing (PyTorch [out, in] stacks -> padded x@W layout)
# ----------------------------------------------------------------------------
def pack_params(params, lane=128, weight_dtype=jnp.bfloat16):
    w1, b1, w2, b2, w3, b3, w4, b4, wp, bp = params
    F, H, L = w1.shape
    Z = w2.shape[1]
    T, O = bp.shape
    FL, FH, FZ, TO = F * L, F * H, F * Z, T * O
    FHp, FLp, TOp = (_round_up(d, lane) for d in (FH, FL, TO))

    w1bd = _pad_to(_block_diag_xw(w1), FL, FHp)                    # [FL,  FHp]
    w2bd = _pad_to(_block_diag_xw(w2), FHp, FZ)                    # [FHp, FZ ]
    w3bd = _pad_to(_block_diag_xw(w3), FZ, FHp)                    # [FZ,  FHp]
    w4bd = _pad_to(_block_diag_xw(w4), FHp, FLp)                   # [FHp, FLp]
    wpf = _pad_to(jnp.transpose(wp, (2, 0, 1)).reshape(FZ, TO), FZ, TOp)
    wzc = jnp.concatenate([w3bd, wpf], axis=1)                     # [FZ, FHp+TOp]

    b1f = _pad_to(b1.reshape(1, FH), 1, FHp)
    b2f = b2.reshape(1, FZ)
    bzc = jnp.concatenate([_pad_to(b3.reshape(1, FH), 1, FHp),
                           _pad_to(bp.reshape(1, TO), 1, TOp)], axis=1)
    b4f = _pad_to(b4.reshape(1, FL), 1, FLp)

    wd = weight_dtype
    return (w1bd.astype(wd), b1f.astype(jnp.float32),
            w2bd.astype(wd), b2f.astype(jnp.float32),
            wzc.astype(wd),  bzc.astype(jnp.float32),
            w4bd.astype(wd), b4f.astype(jnp.float32))


# ----------------------------------------------------------------------------
# Deterministic parameter init (mimics nn.Linear uniform(-1/sqrt(fan_in), ...))
# Stored in PyTorch convention W:[out, in], stacked over features / targets.
# ----------------------------------------------------------------------------
def init_params(key, F, L, H, Z, T, O):
    def linear(k, n, out_dim, in_dim):
        kw, kb = jax.random.split(k)
        bound = 1.0 / jnp.sqrt(in_dim)
        w = jax.random.uniform(kw, (n, out_dim, in_dim), jnp.float32, -bound, bound)
        b = jax.random.uniform(kb, (n, out_dim), jnp.float32, -bound, bound)
        return w, b

    k1, k2, k3, k4, k5 = jax.random.split(key, 5)
    w1, b1 = linear(k1, F, H, L)        # encoder layer 1 (per feature)
    w2, b2 = linear(k2, F, Z, H)        # encoder layer 2
    w3, b3 = linear(k3, F, H, Z)        # decoder layer 1
    w4, b4 = linear(k4, F, L, H)        # decoder layer 2
    wp, bp = linear(k5, T, O, F * Z)    # predictors (per target)
    return (w1, b1, w2, b2, w3, b3, w4, b4, wp, bp)


# ----------------------------------------------------------------------------
# Pure-JAX f32 reference (mirrors the PyTorch loops) for the correctness check
# ----------------------------------------------------------------------------
def miae_reference(x, params):
    w1, b1, w2, b2, w3, b3, w4, b4, wp, bp = params
    B, F, L = x.shape
    decoded, predicted = [], []
    for bidx in range(B):
        enc = []
        for f in range(F):
            xs = x[bidx, f]
            h = jnp.maximum(xs @ w1[f].T + b1[f], 0.0)
            enc.append(h @ w2[f].T + b2[f])
        dec = []
        for f in range(F):
            dh = jnp.maximum(enc[f] @ w3[f].T + b3[f], 0.0)
            dec.append(dh @ w4[f].T + b4[f])
        decoded.append(jnp.stack(dec))
        cat = jnp.concatenate(enc, axis=-1)
        predicted.append(jnp.stack([cat @ wp[t].T + bp[t] for t in range(wp.shape[0])]))
    return jnp.stack(decoded), jnp.stack(predicted)


# TODO(synk): training utilities of the module (Adam step, RMSELoss backward,
# model save/load & metadata JSON, uuid/seed bookkeeping) are host-side /
# autograd concerns with no Pallas forward-kernel equivalent; only the forward
# pass is implemented here.

if __name__ == "__main__":
    # Model hyperparameters (small, consistent with the module's __init__):
    #   n_features=4, inseqlen=8, growth=2 (hidden=16), latent_space_dim=4,
    #   n_targets=2, outseqlen=8, activation='ReLU', batch=2
    B, F, L, G, Z, T, O = 2, 4, 8, 2, 4, 2, 8
    H = G * L

    key = jax.random.PRNGKey(0)
    kx, kp = jax.random.split(key)
    x = jax.random.normal(kx, (B, F, L), dtype=jnp.float32)
    params = init_params(kp, F, L, H, Z, T, O)
    weights = pack_params(params)          # one-time, off the hot path (bf16)

    fwd = jax.jit(functools.partial(miae_forward, T=T, O=O, tile_b=256))
    decoded, predicted = fwd(x, weights)
    jax.block_until_ready((decoded, predicted))

    ref_dec, ref_pred = miae_reference(x, params)
    assert decoded.shape == (B, F, L) and predicted.shape == (B, T, O)
    # bf16 MXU inputs with f32 accumulation: loosened tolerances vs. the f32 ref.
    assert jnp.allclose(decoded, ref_dec, atol=5e-2, rtol=5e-2), \
        float(jnp.max(jnp.abs(decoded - ref_dec)))
    assert jnp.allclose(predicted, ref_pred, atol=5e-2, rtol=5e-2), \
        float(jnp.max(jnp.abs(predicted - ref_pred)))

    print("KERNEL_OK")
</pallas_src>

<mosaic_0001>
module attributes {stable_mosaic.version = 11 : i64} {
  func.func @_miae_kernel(%arg0: i32, %arg1: memref<8x32xbf16, #tpu.memory_space<vmem>>, %arg2: memref<32x128xbf16, #tpu.memory_space<vmem>>, %arg3: memref<1x128xf32, #tpu.memory_space<vmem>>, %arg4: memref<128x16xbf16, #tpu.memory_space<vmem>>, %arg5: memref<1x16xf32, #tpu.memory_space<vmem>>, %arg6: memref<16x256xbf16, #tpu.memory_space<vmem>>, %arg7: memref<1x256xf32, #tpu.memory_space<vmem>>, %arg8: memref<128x128xbf16, #tpu.memory_space<vmem>>, %arg9: memref<1x128xf32, #tpu.memory_space<vmem>>, %arg10: memref<8x128xf32, #tpu.memory_space<vmem>>, %arg11: memref<8x128xf32, #tpu.memory_space<vmem>>) attributes {dimension_semantics = [#tpu.dimension_semantics<parallel>], iteration_bounds = array<i64: 1>, scalar_prefetch = 0 : i64, scratch_operands = 0 : i64, tpu.core_type = #tpu.core_type<tc>, window_params = [{transform_indices = @transform_0, window_bounds = array<i64: 8, 32>}, {pipeline_mode = #tpu.pipeline_mode<synchronous>, transform_indices = @transform_1, window_bounds = array<i64: 32, 128>}, {pipeline_mode = #tpu.pipeline_mode<synchronous>, transform_indices = @transform_2, window_bounds = array<i64: 1, 128>}, {pipeline_mode = #tpu.pipeline_mode<synchronous>, transform_indices = @transform_3, window_bounds = array<i64: 128, 16>}, {pipeline_mode = #tpu.pipeline_mode<synchronous>, transform_indices = @transform_4, window_bounds = array<i64: 1, 16>}, {pipeline_mode = #tpu.pipeline_mode<synchronous>, transform_indices = @transform_5, window_bounds = array<i64: 16, 256>}, {pipeline_mode = #tpu.pipeline_mode<synchronous>, transform_indices = @transform_6, window_bounds = array<i64: 1, 256>}, {pipeline_mode = #tpu.pipeline_mode<synchronous>, transform_indices = @transform_7, window_bounds = array<i64: 128, 128>}, {pipeline_mode = #tpu.pipeline_mode<synchronous>, transform_indices = @transform_8, window_bounds = array<i64: 1, 128>}, {transform_indices = @transform_9, window_bounds = array<i64: 8, 128>}, {transform_indices = @transform_10, window_bounds = array<i64: 8, 128>}]} {
    %c0 = arith.constant 0 : index
    %c0_0 = arith.constant 0 : index
    %0 = vector.load %arg1[%c0, %c0_0] : memref<8x32xbf16, #tpu.memory_space<vmem>>, vector<8x32xbf16>
    %c0_1 = arith.constant 0 : index
    %c0_2 = arith.constant 0 : index
    %1 = vector.load %arg2[%c0_1, %c0_2] : memref<32x128xbf16, #tpu.memory_space<vmem>>, vector<32x128xbf16>
    %cst = arith.constant dense<0.000000e+00> : vector<8x128xf32>
    %2 = tpu.matmul %0, %1, %cst {dimension_numbers = #tpu.dot_dimension_numbers<[1], [0], [0], [1], [0, 0, 1, 1], [], []>} : vector<8x32xbf16>, vector<32x128xbf16>, vector<8x128xf32> -> vector<8x128xf32>
    %c0_3 = arith.constant 0 : index
    %c0_4 = arith.constant 0 : index
    %3 = vector.load %arg3[%c0_3, %c0_4] : memref<1x128xf32, #tpu.memory_space<vmem>>, vector<1x128xf32>
    %4 = vector.broadcast %3 : vector<1x128xf32> to vector<8x128xf32>
    %5 = arith.addf %2, %4 : vector<8x128xf32>
    %cst_5 = arith.constant 0.000000e+00 : f32
    %6 = vector.broadcast %cst_5 : f32 to vector<8x128xf32>
    %7 = arith.maximumf %5, %6 : vector<8x128xf32>
    %8 = arith.truncf %7 : vector<8x128xf32> to vector<8x128xbf16>
    %c0_6 = arith.constant 0 : index
    %c0_7 = arith.constant 0 : index
    %9 = vector.load %arg4[%c0_6, %c0_7] : memref<128x16xbf16, #tpu.memory_space<vmem>>, vector<128x16xbf16>
    %cst_8 = arith.constant dense<0.000000e+00> : vector<8x16xf32>
    %10 = tpu.matmul %8, %9, %cst_8 {dimension_numbers = #tpu.dot_dimension_numbers<[1], [0], [0], [1], [0, 0, 1, 1], [], []>} : vector<8x128xbf16>, vector<128x16xbf16>, vector<8x16xf32> -> vector<8x16xf32>
    %c0_9 = arith.constant 0 : index
    %c0_10 = arith.constant 0 : index
    %11 = vector.load %arg5[%c0_9, %c0_10] : memref<1x16xf32, #tpu.memory_space<vmem>>, vector<1x16xf32>
    %12 = vector.broadcast %11 : vector<1x16xf32> to vector<8x16xf32>
    %13 = arith.addf %10, %12 : vector<8x16xf32>
    %14 = arith.truncf %13 : vector<8x16xf32> to vector<8x16xbf16>
    %c0_11 = arith.constant 0 : index
    %c0_12 = arith.constant 0 : index
    %15 = vector.load %arg6[%c0_11, %c0_12] : memref<16x256xbf16, #tpu.memory_space<vmem>>, vector<16x256xbf16>
    %cst_13 = arith.constant dense<0.000000e+00> : vector<8x256xf32>
    %16 = tpu.matmul %14, %15, %cst_13 {dimension_numbers = #tpu.dot_dimension_numbers<[1], [0], [0], [1], [0, 0, 1, 1], [], []>} : vector<8x16xbf16>, vector<16x256xbf16>, vector<8x256xf32> -> vector<8x256xf32>
    %c0_14 = arith.constant 0 : index
    %c0_15 = arith.constant 0 : index
    %17 = vector.load %arg7[%c0_14, %c0_15] : memref<1x256xf32, #tpu.memory_space<vmem>>, vector<1x256xf32>
    %18 = vector.broadcast %17 : vector<1x256xf32> to vector<8x256xf32>
    %19 = arith.addf %16, %18 : vector<8x256xf32>
    %20 = vector.extract_strided_slice %19 {offsets = [0, 0], sizes = [8, 128], strides = [1, 1]} : vector<8x256xf32> to vector<8x128xf32>
    %cst_16 = arith.constant 0.000000e+00 : f32
    %21 = vector.broadcast %cst_16 : f32 to vector<8x128xf32>
    %22 = arith.maximumf %20, %21 : vector<8x128xf32>
    %23 = arith.truncf %22 : vector<8x128xf32> to vector<8x128xbf16>
    %c0_17 = arith.constant 0 : index
    %c0_18 = arith.constant 0 : index
    %24 = vector.load %arg8[%c0_17, %c0_18] : memref<128x128xbf16, #tpu.memory_space<vmem>>, vector<128x128xbf16>
    %cst_19 = arith.constant dense<0.000000e+00> : vector<8x128xf32>
    %25 = tpu.matmul %23, %24, %cst_19 {dimension_numbers = #tpu.dot_dimension_numbers<[1], [0], [0], [1], [0, 0, 1, 1], [], []>} : vector<8x128xbf16>, vector<128x128xbf16>, vector<8x128xf32> -> vector<8x128xf32>
    %c0_20 = arith.constant 0 : index
    %c0_21 = arith.constant 0 : index
    %26 = vector.load %arg9[%c0_20, %c0_21] : memref<1x128xf32, #tpu.memory_space<vmem>>, vector<1x128xf32>
    %27 = vector.broadcast %26 : vector<1x128xf32> to vector<8x128xf32>
    %28 = arith.addf %25, %27 : vector<8x128xf32>
    %c0_22 = arith.constant 0 : index
    %c0_23 = arith.constant 0 : index
    %29 = vector.load %arg10[%c0_22, %c0_23] : memref<8x128xf32, #tpu.memory_space<vmem>>, vector<8x128xf32>
    tpu.vector_store %arg10[%c0_22, %c0_23], %28 {strides = array<i32>} : memref<8x128xf32, #tpu.memory_space<vmem>>, vector<8x128xf32>,
    %30 = vector.extract_strided_slice %19 {offsets = [0, 128], sizes = [8, 128], strides = [1, 1]} : vector<8x256xf32> to vector<8x128xf32>
    %c0_24 = arith.constant 0 : index
    %c0_25 = arith.constant 0 : index
    %31 = vector.load %arg11[%c0_24, %c0_25] : memref<8x128xf32, #tpu.memory_space<vmem>>, vector<8x128xf32>
    tpu.vector_store %arg11[%c0_24, %c0_25], %30 {strides = array<i32>} : memref<8x128xf32, #tpu.memory_space<vmem>>, vector<8x128xf32>,
    return
  }
  func.func @transform_0(%arg0: i32) -> (i32, i32) {
    %c0_i32 = arith.constant 0 : i32
    %c0_i32_0 = arith.constant 0 : i32
    return %arg0, %c0_i32 : i32, i32
  }
  func.func @transform_1(%arg0: i32) -> (i32, i32) {
    %c0_i32 = arith.constant 0 : i32
    %c0_i32_0 = arith.constant 0 : i32
    %c0_i32_1 = arith.constant 0 : i32
    return %c0_i32, %c0_i32_0 : i32, i32
  }
  func.func @transform_2(%arg0: i32) -> (i32, i32) {
    %c0_i32 = arith.constant 0 : i32
    %c0_i32_0 = arith.constant 0 : i32
    %c0_i32_1 = arith.constant 0 : i32
    return %c0_i32, %c0_i32_0 : i32, i32
  }
  func.func @transform_3(%arg0: i32) -> (i32, i32) {
    %c0_i32 = arith.constant 0 : i32
    %c0_i32_0 = arith.constant 0 : i32
    %c0_i32_1 = arith.constant 0 : i32
    return %c0_i32, %c0_i32_0 : i32, i32
  }
  func.func @transform_4(%arg0: i32) -> (i32, i32) {
    %c0_i32 = arith.constant 0 : i32
    %c0_i32_0 = arith.constant 0 : i32
    %c0_i32_1 = arith.constant 0 : i32
    return %c0_i32, %c0_i32_0 : i32, i32
  }
  func.func @transform_5(%arg0: i32) -> (i32, i32) {
    %c0_i32 = arith.constant 0 : i32
    %c0_i32_0 = arith.constant 0 : i32
    %c0_i32_1 = arith.constant 0 : i32
    return %c0_i32, %c0_i32_0 : i32, i32
  }
  func.func @transform_6(%arg0: i32) -> (i32, i32) {
    %c0_i32 = arith.constant 0 : i32
    %c0_i32_0 = arith.constant 0 : i32
    %c0_i32_1 = arith.constant 0 : i32
    return %c0_i32, %c0_i32_0 : i32, i32
  }
  func.func @transform_7(%arg0: i32) -> (i32, i32) {
    %c0_i32 = arith.constant 0 : i32
    %c0_i32_0 = arith.constant 0 : i32
    %c0_i32_1 = arith.constant 0 : i32
    return %c0_i32, %c0_i32_0 : i32, i32
  }
  func.func @transform_8(%arg0: i32) -> (i32, i32) {
    %c0_i32 = arith.constant 0 : i32
    %c0_i32_0 = arith.constant 0 : i32
    %c0_i32_1 = arith.constant 0 : i32
    return %c0_i32, %c0_i32_0 : i32, i32
  }
  func.func @transform_9(%arg0: i32) -> (i32, i32) {
    %c0_i32 = arith.constant 0 : i32
    %c0_i32_0 = arith.constant 0 : i32
    return %arg0, %c0_i32 : i32, i32
  }
  func.func @transform_10(%arg0: i32) -> (i32, i32) {
    %c0_i32 = arith.constant 0 : i32
    %c0_i32_0 = arith.constant 0 : i32
    return %arg0, %c0_i32 : i32, i32
  }
}

</mosaic_0001>

<llo_original>
// kernel: miae_forward.1
$region0: #{miae_forward.1}
  #allocation0 [shape = 'u32[]', space=smem, size = 0x4, offset = 0x4, fixed_abs, tag = 'smem constant byte address 0x4 - core index']
  #allocation1 [shape = 'u32[72,128]{1,0:T(1,128)}', space=vmem, size = 0x9000, scoped, tag = 'internal scratch']
  %s0 = inlined_call_operand.vmem [shape: bf16[8,32], index: 0, kind: input, shape index: {}]
  %s1 = inlined_call_operand.vmem [shape: bf16[32,128], index: 1, kind: input, shape index: {}]
  %s2 = inlined_call_operand.vmem [shape: f32[1,128], index: 2, kind: input, shape index: {}]
  %s3 = inlined_call_operand.vmem [shape: bf16[128,16], index: 3, kind: input, shape index: {}]
  %s4 = inlined_call_operand.vmem [shape: f32[1,16], index: 4, kind: input, shape index: {}]
  %s5 = inlined_call_operand.vmem [shape: bf16[16,256], index: 5, kind: input, shape index: {}]
  %s6 = inlined_call_operand.vmem [shape: f32[1,256], index: 6, kind: input, shape index: {}]
  %s7 = inlined_call_operand.vmem [shape: bf16[128,128], index: 7, kind: input, shape index: {}]
  %s8 = inlined_call_operand.vmem [shape: f32[1,128], index: 8, kind: input, shape index: {}]
  %s9 = inlined_call_operand.vmem [shape: f32[8,128], index: 9, kind: output, shape index: {0}]
  %s10 = inlined_call_operand.vmem [shape: f32[8,128], index: 10, kind: output, shape index: {1}]
  %11 = xla_tuple %s9, %s10
  %s12 = sld [smem:[#allocation0]]
  $region54: #{miae_forward.1} parent=0
    _
  %s14 = ssub.s32 1, %s12
  %s15 = scalar_select 0, %s14, %s12
  // Predicated region
  $region2: #{miae_forward.1} parent=0 // pred_check
    _
  $region3: #{miae_forward.1} parent=0 // pred_check_branch
    %17 = sbr.rel (0) target = $region5
  $region4: #{miae_forward.1} parent=0 // pred_region
    _
  $region5: #{miae_forward.1} parent=0 // pred_fallthru
    _
  // Predicated region
  $region6: #{miae_forward.1} parent=0 // pred_check
    _
  $region7: #{miae_forward.1} parent=0 // pred_check_branch
    %19 = sbr.rel (0) target = $region9
  $region8: #{miae_forward.1} parent=0 // pred_region
    _
  $region9: #{miae_forward.1} parent=0 // pred_fallthru
    _
  // Predicated region
  $region10: #{miae_forward.1} parent=0 // pred_check
    _
  $region11: #{miae_forward.1} parent=0 // pred_check_branch
    %21 = sbr.rel (0) target = $region13
  $region12: #{miae_forward.1} parent=0 // pred_region
    _
  $region13: #{miae_forward.1} parent=0 // pred_fallthru
    _
  // Predicated region
  $region14: #{miae_forward.1} parent=0 // pred_check
    _
  $region15: #{miae_forward.1} parent=0 // pred_check_branch
    %23 = sbr.rel (0) target = $region17
  $region16: #{miae_forward.1} parent=0 // pred_region
    _
  $region17: #{miae_forward.1} parent=0 // pred_fallthru
    _
  // Predicated region
  $region18: #{miae_forward.1} parent=0 // pred_check
    _
  $region19: #{miae_forward.1} parent=0 // pred_check_branch
    %25 = sbr.rel (0) target = $region21
  $region20: #{miae_forward.1} parent=0 // pred_region
    _
  $region21: #{miae_forward.1} parent=0 // pred_fallthru
    _
  // Predicated region
  $region22: #{miae_forward.1} parent=0 // pred_check
    _
  $region23: #{miae_forward.1} parent=0 // pred_check_branch
    %27 = sbr.rel (0) target = $region25
  $region24: #{miae_forward.1} parent=0 // pred_region
    _
  $region25: #{miae_forward.1} parent=0 // pred_fallthru
    _
  // Predicated region
  $region26: #{miae_forward.1} parent=0 // pred_check
    _
  $region27: #{miae_forward.1} parent=0 // pred_check_branch
    %29 = sbr.rel (0) target = $region29
  $region28: #{miae_forward.1} parent=0 // pred_region
    _
  $region29: #{miae_forward.1} parent=0 // pred_fallthru
    _
  // Predicated region
  $region30: #{miae_forward.1} parent=0 // pred_check
    _
  $region31: #{miae_forward.1} parent=0 // pred_check_branch
    %31 = sbr.rel (0) target = $region33
  $region32: #{miae_forward.1} parent=0 // pred_region
    _
  $region33: #{miae_forward.1} parent=0 // pred_fallthru
    _
  // Predicated region
  $region34: #{miae_forward.1} parent=0 // pred_check
    _
  $region35: #{miae_forward.1} parent=0 // pred_check_branch
    %33 = sbr.rel (0) target = $region37
  $region36: #{miae_forward.1} parent=0 // pred_region
    _
  $region37: #{miae_forward.1} parent=0 // pred_fallthru
    _
  %v35 = vld [vmem:[%s0] sm:$0xf]
  %v36 = vld [vmem:[%s1] sm:$0xf]
  %v37 = vld [vmem:[%s1 + $0x4] sm:$0xf]
  %v38 = vld [vmem:[%s1 + $0x8] sm:$0xf]
  %v39 = vld [vmem:[%s1 + $0xc] sm:$0xf]
  %v40 = vld [vmem:[%s2] sm:$0x1]
  %v42 = vperm.slane %v40, 0
  %v48 = vunpack.c.l.b16 %v36
  %v49 = vunpack.c.l.b16 %v37
  %v50 = vunpack.c.l.b16 %v38
  %v51 = vunpack.c.l.b16 %v39
  %v52 = vpack.c.b16 %v49, %v48
  %v53 = vpack.c.b16 %v51, %v50
  %vm56 = vcmask 261120
  %v58 = vsel %vm56, %v35, 0
  %60 = vmatpush.bf16.msra.mxu0 0
  %61 = vmatpush.bf16.msra.mxu0 0
  %62 = vmatpush.bf16.msra.mxu0 0
  %63 = vmatpush.bf16.msra.mxu0 0
  %64 = vmatpush.bf16.msra.mxu0 0
  %65 = vmatpush.bf16.msra.mxu0 0
  %66 = vmatpush.bf16.msra.mxu0 %v53
  %67 = vmatpush.bf16.msra.mxu0 %v52
  %68 = vmatmul.bf16.gmra.mxu0 %v58
  %v69 = vpop.f32.mrf.mxu0
  %v70 = vadd.f32 %v42, %v69
  %v71 = vpop.f32.mrf.mxu0
  %72 = vdwg.mxu0
  %v73 = vmax.f32 %v70, 0.0
  %v74 = vpack.c.bf16 %v73, %v73
  %v75 = vld [vmem:[%s3] sm:$0xf]
  %v76 = vld [vmem:[%s3 + $0x4] sm:$0xf]
  %v77 = vld [vmem:[%s3 + $0x8] sm:$0xf]
  %v78 = vld [vmem:[%s3 + $0xc] sm:$0xf]
  %v79 = vld [vmem:[%s3 + $0x10] sm:$0xf]
  %v80 = vld [vmem:[%s3 + $0x14] sm:$0xf]
  %v81 = vld [vmem:[%s3 + $0x18] sm:$0xf]
  %v82 = vld [vmem:[%s3 + $0x1c] sm:$0xf]
  %v83 = vld [vmem:[%s3 + $0x20] sm:$0xf]
  %v84 = vld [vmem:[%s3 + $0x24] sm:$0xf]
  %v85 = vld [vmem:[%s3 + $0x28] sm:$0xf]
  %v86 = vld [vmem:[%s3 + $0x2c] sm:$0xf]
  %v87 = vld [vmem:[%s3 + $0x30] sm:$0xf]
  %v88 = vld [vmem:[%s3 + $0x34] sm:$0xf]
  %v89 = vld [vmem:[%s3 + $0x38] sm:$0xf]
  %v90 = vld [vmem:[%s3 + $0x3c] sm:$0xf]
  %v91 = vld [vmem:[%s4] sm:$0x1]
  %v93 = vperm.slane %v91, 0
  %v111 = vunpack.c.l.b16 %v75
  %v112 = vunpack.c.l.b16 %v76
  %v113 = vunpack.c.l.b16 %v77
  %v114 = vunpack.c.l.b16 %v78
  %v115 = vunpack.c.l.b16 %v79
  %v116 = vunpack.c.l.b16 %v80
  %v117 = vunpack.c.l.b16 %v81
  %v118 = vunpack.c.l.b16 %v82
  %v119 = vunpack.c.l.b16 %v83
  %v120 = vunpack.c.l.b16 %v84
  %v121 = vunpack.c.l.b16 %v85
  %v122 = vunpack.c.l.b16 %v86
  %v123 = vunpack.c.l.b16 %v87
  %v124 = vunpack.c.l.b16 %v88
  %v125 = vunpack.c.l.b16 %v89
  %v126 = vunpack.c.l.b16 %v90
  %v127 = vpack.c.b16 %v112, %v111
  %v128 = vpack.c.b16 %v114, %v113
  %v129 = vpack.c.b16 %v116, %v115
  %v130 = vpack.c.b16 %v118, %v117
  %v131 = vpack.c.b16 %v120, %v119
  %v132 = vpack.c.b16 %v122, %v121
  %v133 = vpack.c.b16 %v124, %v123
  %v134 = vpack.c.b16 %v126, %v125
  %143 = vmatpush.bf16.msra.mxu0 %v134
  %144 = vmatpush.bf16.msra.mxu0 %v133
  %145 = vmatpush.bf16.msra.mxu0 %v132
  %146 = vmatpush.bf16.msra.mxu0 %v131
  %147 = vmatpush.bf16.msra.mxu0 %v130
  %148 = vmatpush.bf16.msra.mxu0 %v129
  %149 = vmatpush.bf16.msra.mxu0 %v128
  %150 = vmatpush.bf16.msra.mxu0 %v127
  %151 = vmatmul.bf16.gmra.mxu0 %v74
  %v152 = vpop.f32.mrf.mxu0
  %v153 = vadd.f32 %v93, %v152
  %v154 = vpop.f32.mrf.mxu0
  %155 = vdwg.mxu0
  %v156 = vpack.c.bf16 %v153, %v153
  %v157 = vld [vmem:[%s5] sm:$0xff]
  %v158 = vld [vmem:[%s5 + $0x8] sm:$0xff]
  %v159 = vld [vmem:[%s6] sm:$0x3]
  %v161 = vperm.slane %v159, 0
  %v162 = vperm.slane %v159, 1
  %v167 = vunpack.c.l.b16 %v157
  %v168 = vunpack.c.h.b16 %v157
  %v169 = vunpack.c.l.b16 %v158
  %v170 = vunpack.c.h.b16 %v158
  %v171 = vpack.c.b16 %v169, %v167
  %v172 = vpack.c.b16 %v170, %v168
  %vm175 = vcmask 130048
  %v177 = vsel %vm175, %v156, 0
  %179 = vmatpush.bf16.msra.mxu0 0
  %180 = vmatpush.bf16.msra.mxu0 0
  %181 = vmatpush.bf16.msra.mxu0 0
  %182 = vmatpush.bf16.msra.mxu0 0
  %183 = vmatpush.bf16.msra.mxu0 0
  %184 = vmatpush.bf16.msra.mxu0 0
  %185 = vmatpush.bf16.msra.mxu0 0
  %186 = vmatpush.bf16.msra.mxu0 %v171
  %187 = vmatmul.bf16.gmra.mxu0 %v177
  %v188 = vpop.f32.mrf.mxu0
  %v189 = vadd.f32 %v161, %v188
  %v190 = vpop.f32.mrf.mxu0
  %191 = vdwg.mxu0
  %192 = vmatpush.bf16.msra.mxu0 0
  %193 = vmatpush.bf16.msra.mxu0 0
  %194 = vmatpush.bf16.msra.mxu0 0
  %195 = vmatpush.bf16.msra.mxu0 0
  %196 = vmatpush.bf16.msra.mxu0 0
  %197 = vmatpush.bf16.msra.mxu0 0
  %198 = vmatpush.bf16.msra.mxu0 0
  %199 = vmatpush.bf16.msra.mxu0 %v172
  %200 = vmatmul.bf16.gmra.mxu0 %v177
  %v201 = vpop.f32.mrf.mxu0
  %v202 = vadd.f32 %v162, %v201
  %v203 = vpop.f32.mrf.mxu0
  %204 = vdwg.mxu0
  %v205 = vmax.f32 %v189, 0.0
  %v206 = vpack.c.bf16 %v205, %v205
  %v207 = vld [vmem:[%s7] sm:$0xf]
  %v208 = vld [vmem:[%s7 + $0x4] sm:$0xf]
  %v209 = vld [vmem:[%s7 + $0x8] sm:$0xf]
  %v210 = vld [vmem:[%s7 + $0xc] sm:$0xf]
  %v211 = vld [vmem:[%s7 + $0x10] sm:$0xf]
  %v212 = vld [vmem:[%s7 + $0x14] sm:$0xf]
  %v213 = vld [vmem:[%s7 + $0x18] sm:$0xf]
  %v214 = vld [vmem:[%s7 + $0x1c] sm:$0xf]
  %v215 = vld [vmem:[%s7 + $0x20] sm:$0xf]
  %v216 = vld [vmem:[%s7 + $0x24] sm:$0xf]
  %v217 = vld [vmem:[%s7 + $0x28] sm:$0xf]
  %v218 = vld [vmem:[%s7 + $0x2c] sm:$0xf]
  %v219 = vld [vmem:[%s7 + $0x30] sm:$0xf]
  %v220 = vld [vmem:[%s7 + $0x34] sm:$0xf]
  %v221 = vld [vmem:[%s7 + $0x38] sm:$0xf]
  %v222 = vld [vmem:[%s7 + $0x3c] sm:$0xf]
  %v223 = vld [vmem:[%s8] sm:$0x1]
  %v225 = vperm.slane %v223, 0
  %v243 = vunpack.c.l.b16 %v207
  %v244 = vunpack.c.l.b16 %v208
  %v245 = vunpack.c.l.b16 %v209
  %v246 = vunpack.c.l.b16 %v210
  %v247 = vunpack.c.l.b16 %v211
  %v248 = vunpack.c.l.b16 %v212
  %v249 = vunpack.c.l.b16 %v213
  %v250 = vunpack.c.l.b16 %v214
  %v251 = vunpack.c.l.b16 %v215
  %v252 = vunpack.c.l.b16 %v216
  %v253 = vunpack.c.l.b16 %v217
  %v254 = vunpack.c.l.b16 %v218
  %v255 = vunpack.c.l.b16 %v219
  %v256 = vunpack.c.l.b16 %v220
  %v257 = vunpack.c.l.b16 %v221
  %v258 = vunpack.c.l.b16 %v222
  %v259 = vpack.c.b16 %v244, %v243
  %v260 = vpack.c.b16 %v246, %v245
  %v261 = vpack.c.b16 %v248, %v247
  %v262 = vpack.c.b16 %v250, %v249
  %v263 = vpack.c.b16 %v252, %v251
  %v264 = vpack.c.b16 %v254, %v253
  %v265 = vpack.c.b16 %v256, %v255
  %v266 = vpack.c.b16 %v258, %v257
  %275 = vmatpush.bf16.msra.mxu0 %v266
  %276 = vmatpush.bf16.msra.mxu0 %v265
  %277 = vmatpush.bf16.msra.mxu0 %v264
  %278 = vmatpush.bf16.msra.mxu0 %v263
  %279 = vmatpush.bf16.msra.mxu0 %v262
  %280 = vmatpush.bf16.msra.mxu0 %v261
  %281 = vmatpush.bf16.msra.mxu0 %v260
  %282 = vmatpush.bf16.msra.mxu0 %v259
  %283 = vmatmul.bf16.gmra.mxu0 %v206
  %v284 = vpop.f32.mrf.mxu0
  %v285 = vadd.f32 %v225, %v284
  %v286 = vpop.f32.mrf.mxu0
  %287 = vdwg.mxu0
  %288 = vst [vmem:[%s9] sm:$0xff] %v285
  %289 = vst [vmem:[%s10] sm:$0xff] %v202
  // Predicated region
  $region38: #{miae_forward.1} parent=0 // pred_check
    _
  $region39: #{miae_forward.1} parent=0 // pred_check_branch
    %291 = sbr.rel (0) target = $region41
  $region40: #{miae_forward.1} parent=0 // pred_region
    _
  $region41: #{miae_forward.1} parent=0 // pred_fallthru
    _
  // Predicated region
  $region42: #{miae_forward.1} parent=0 // pred_check
    _
  $region43: #{miae_forward.1} parent=0 // pred_check_branch
    %293 = sbr.rel (0) target = $region45
  $region44: #{miae_forward.1} parent=0 // pred_region
    _
  $region45: #{miae_forward.1} parent=0 // pred_fallthru
    _
  // Predicated region
  $region46: #{miae_forward.1} parent=0 // pred_check
    _
  $region47: #{miae_forward.1} parent=0 // pred_check_branch
    %295 = sbr.rel (0) target = $region49
  $region48: #{miae_forward.1} parent=0 // pred_region
    _
  $region49: #{miae_forward.1} parent=0 // pred_fallthru
    _
  // Predicated region
  $region50: #{miae_forward.1} parent=0 // pred_check
    _
  $region51: #{miae_forward.1} parent=0 // pred_check_branch
    %297 = sbr.rel (0) target = $region53
  $region52: #{miae_forward.1} parent=0 // pred_region
    _
  $region53: #{miae_forward.1} parent=0 // pred_fallthru
    _

</llo_original>
